<compile_context>
chip_gen: v5e
topology: v5e:2x2
jax: 0.10.0
libtpu: 0.0.40
codegen_flags: <defaults>
</compile_context>

<pallas_src>
import functools

import jax
import jax.numpy as jnp
from jax.experimental import pallas as pl
from jax.experimental.pallas import tpu as pltpu


def _basic_block_kernel(xe_ref, w1_ref, w2_ref, g1_ref, b1_ref, g2_ref, b2_ref,
                        m_ref, o_ref, he_ref, *, S, E, Wp, Cp, eps, inv_n):
    """Fused BasicBlock on the padded-flat layout.

    xe_ref: (Cp, Sext)   zero-extended padded-flat input (Sext = S + 2E)
    w?_ref: (Cp, 9*Cp)   conv weights, columns ordered [tap-major, c_in-minor]
    g?/b?:  (Cp, 1)      BN affine params
    m_ref:  (1, S)       1.0 at interior (real) positions, 0.0 on the halo ring
    o_ref:  (Cp, S)      output in padded-flat layout (ring positions zeroed)
    he_ref: (Cp, Sext)   VMEM scratch for the extended intermediate activation
    """
    mask = m_ref[...]                         # (1, S) broadcasts over channels

    def conv3x3(src_ref, w_ref):
        # Stack the 9 lane-shifted tap windows along sublanes and contract
        # once on the MXU: (Cp, 9*Cp) @ (9*Cp, S) -> (Cp, S).
        wins = []
        for ki in range(3):
            for kj in range(3):
                d = (ki - 1) * Wp + (kj - 1)          # lane offset of this tap
                wins.append(src_ref[:, E + d:E + d + S])
        stacked = jnp.concatenate(wins, axis=0)       # (9*Cp, S)
        return jnp.dot(w_ref[...], stacked, preferred_element_type=jnp.float32)

    def batchnorm(y, g_ref, b_ref):
        # Training-mode batch stats over interior positions only (masked),
        # biased variance, per channel row.
        mean = jnp.sum(y * mask, axis=1, keepdims=True) * inv_n
        diff = (y - mean) * mask
        var = jnp.sum(diff * diff, axis=1, keepdims=True) * inv_n
        return (y - mean) * jax.lax.rsqrt(var + eps) * g_ref[...] + b_ref[...]

    x_center = xe_ref[:, E:E + S]             # unshifted input (identity branch)

    # ---- conv1 -> bn1 -> relu; zero the halo ring so it acts as conv2 padding.
    y1 = conv3x3(xe_ref, w1_ref)
    h = jnp.maximum(batchnorm(y1, g1_ref, b1_ref), 0.0) * mask

    # ---- stage the intermediate into the extended VMEM scratch (one store,
    #      zero lane-extensions concatenated in).
    halo = jnp.zeros((Cp, E), jnp.float32)
    he_ref[...] = jnp.concatenate([halo, h, halo], axis=1)

    # ---- conv2 -> bn2 -> + identity -> relu.
    y2 = conv3x3(he_ref, w2_ref)
    out = batchnorm(y2, g2_ref, b2_ref) + x_center
    out = jnp.maximum(out, 0.0) * mask
    o_ref[...] = out.astype(o_ref.dtype)


def _full_spec(shape):
    return pl.BlockSpec(shape, lambda i: (0,) * len(shape))


def basic_block_forward(x_nchw, params, *, eps=1e-5):
    """x_nchw: (N, C, H, W).  Returns (N, C, H, W) (stride=1, c_in == c_out)."""
    N, C, H, W = x_nchw.shape
    Cout = params["w1"].shape[0]
    assert Cout == C and params["w2"].shape == (C, C, 3, 3), \
        "reference BasicBlock is only runnable with stride=1 and c_in == c_out"

    f32 = jnp.float32
    Cp = max(8, -(-C // 8) * 8)          # pad channels to a sublane multiple
    Hp, Wp = H + 2, W + 2                # spatial zero-padding (padding=1)
    S = N * Hp * Wp                      # flattened padded spatial (lane axis)
    E = Wp + 1                           # lane extension so every tap slices in-bounds
    Sext = S + 2 * E

    # ---- layout prep: channels -> sublanes, flattened padded spatial -> lanes.
    xp = jnp.pad(x_nchw.astype(f32), ((0, 0), (0, Cp - C), (1, 1), (1, 1)))
    x_cs = jnp.transpose(xp, (1, 0, 2, 3)).reshape(Cp, S)
    x_ext = jnp.pad(x_cs, ((0, 0), (E, E)))

    # Interior mask: 1 at real output positions, 0 on the padding ring.
    mask = (jnp.zeros((N, Hp, Wp), f32)
            .at[:, 1:H + 1, 1:W + 1].set(1.0).reshape(1, S))

    def prep_w(w):  # (Cout, Cin, 3, 3) -> (Cp, 9*Cp), columns = tap*Cp + c_in
        wp_ = jnp.zeros((Cp, Cp, 3, 3), f32).at[:w.shape[0], :w.shape[1]].set(w)
        return jnp.transpose(wp_, (0, 2, 3, 1)).reshape(Cp, 9 * Cp)

    def prep_gb(g, b):
        gp = jnp.ones((Cp,), f32).at[:C].set(g).reshape(Cp, 1)
        bp = jnp.zeros((Cp,), f32).at[:C].set(b).reshape(Cp, 1)
        return gp, bp

    w1r, w2r = prep_w(params["w1"]), prep_w(params["w2"])
    g1, b1 = prep_gb(params["g1"], params["b1"])
    g2, b2 = prep_gb(params["g2"], params["b2"])

    kernel = functools.partial(_basic_block_kernel, S=S, E=E, Wp=Wp, Cp=Cp,
                               eps=eps, inv_n=1.0 / float(N * H * W))

    args = (x_ext, w1r, w2r, g1, b1, g2, b2, mask)
    y_cs = pl.pallas_call(
        kernel,
        grid=(1,),
        in_specs=[_full_spec(a.shape) for a in args],
        out_specs=_full_spec((Cp, S)),
        out_shape=jax.ShapeDtypeStruct((Cp, S), x_nchw.dtype),
        scratch_shapes=[pltpu.VMEM((Cp, Sext), jnp.float32)],
        compiler_params=pltpu.CompilerParams(
            dimension_semantics=("arbitrary",)),
    )(*args)

    # Extract interior positions and restore NCHW.
    y = y_cs.reshape(Cp, N, Hp, Wp)[:C, :, 1:H + 1, 1:W + 1]
    return jnp.transpose(y, (1, 0, 2, 3)).astype(x_nchw.dtype)


def _reference_forward(x, params, eps=1e-5):
    """Pure-JAX reference (PyTorch training-mode BN semantics)."""
    def conv(h, w):
        return jax.lax.conv_general_dilated(
            h, w, window_strides=(1, 1), padding=((1, 1), (1, 1)),
            dimension_numbers=("NCHW", "OIHW", "NCHW"),
            precision=jax.lax.Precision.HIGHEST)

    def bn(h, g, b):
        mean = jnp.mean(h, axis=(0, 2, 3), keepdims=True)
        var = jnp.mean((h - mean) ** 2, axis=(0, 2, 3), keepdims=True)
        return ((h - mean) * jax.lax.rsqrt(var + eps)
                * g.reshape(1, -1, 1, 1) + b.reshape(1, -1, 1, 1))

    h = jnp.maximum(bn(conv(x, params["w1"]), params["g1"], params["b1"]), 0.0)
    y = bn(conv(h, params["w2"]), params["g2"], params["b2"]) + x
    return jnp.maximum(y, 0.0)


if __name__ == "__main__":
    # Small shapes consistent with the module: N=2, c_in=c_out=4, H=W=16,
    # stride=1 (the only configuration the reference BasicBlock can execute).
    N, C, H, W = 2, 4, 16, 16

    key = jax.random.PRNGKey(0)
    ks = jax.random.split(key, 3)
    x = jax.random.normal(ks[0], (N, C, H, W), jnp.float32)
    params = dict(
        w1=jax.random.normal(ks[1], (C, C, 3, 3), jnp.float32) * 0.1,
        g1=jnp.ones((C,), jnp.float32),   # BN affine defaults (weight=1)
        b1=jnp.zeros((C,), jnp.float32),  # BN affine defaults (bias=0)
        w2=jax.random.normal(ks[2], (C, C, 3, 3), jnp.float32) * 0.1,
        g2=jnp.ones((C,), jnp.float32),
        b2=jnp.zeros((C,), jnp.float32),
    )

    out = basic_block_forward(x, params)
    out = jax.block_until_ready(out)
    assert out.shape == (N, C, H, W), out.shape
    assert bool(jnp.all(jnp.isfinite(out)))

    ref = _reference_forward(x, params)
    err = float(jnp.max(jnp.abs(out - ref)))
    assert err < 5e-2, f"max abs error vs reference: {err}"
    print("KERNEL_OK")
</pallas_src>

<mosaic_0001>
module attributes {stable_mosaic.version = 11 : i64} {
  func.func @_basic_block_kernel(%arg0: i32, %arg1: memref<8x686xf32, #tpu.memory_space<vmem>>, %arg2: memref<8x72xf32, #tpu.memory_space<vmem>>, %arg3: memref<8x72xf32, #tpu.memory_space<vmem>>, %arg4: memref<8x1xf32, #tpu.memory_space<vmem>>, %arg5: memref<8x1xf32, #tpu.memory_space<vmem>>, %arg6: memref<8x1xf32, #tpu.memory_space<vmem>>, %arg7: memref<8x1xf32, #tpu.memory_space<vmem>>, %arg8: memref<1x648xf32, #tpu.memory_space<vmem>>, %arg9: memref<8x648xf32, #tpu.memory_space<vmem>>, %arg10: memref<8x686xf32, #tpu.memory_space<vmem>>) attributes {dimension_semantics = [#tpu.dimension_semantics<arbitrary>], iteration_bounds = array<i64: 1>, scalar_prefetch = 0 : i64, scratch_operands = 1 : i64, tpu.core_type = #tpu.core_type<tc>, window_params = [{pipeline_mode = #tpu.pipeline_mode<synchronous>, transform_indices = @transform_0, window_bounds = array<i64: 8, 686>}, {pipeline_mode = #tpu.pipeline_mode<synchronous>, transform_indices = @transform_1, window_bounds = array<i64: 8, 72>}, {pipeline_mode = #tpu.pipeline_mode<synchronous>, transform_indices = @transform_2, window_bounds = array<i64: 8, 72>}, {pipeline_mode = #tpu.pipeline_mode<synchronous>, transform_indices = @transform_3, window_bounds = array<i64: 8, 1>}, {pipeline_mode = #tpu.pipeline_mode<synchronous>, transform_indices = @transform_4, window_bounds = array<i64: 8, 1>}, {pipeline_mode = #tpu.pipeline_mode<synchronous>, transform_indices = @transform_5, window_bounds = array<i64: 8, 1>}, {pipeline_mode = #tpu.pipeline_mode<synchronous>, transform_indices = @transform_6, window_bounds = array<i64: 8, 1>}, {pipeline_mode = #tpu.pipeline_mode<synchronous>, transform_indices = @transform_7, window_bounds = array<i64: 1, 648>}, {pipeline_mode = #tpu.pipeline_mode<synchronous>, transform_indices = @transform_8, window_bounds = array<i64: 8, 648>}]} {
    %c0 = arith.constant 0 : index
    %c0_0 = arith.constant 0 : index
    %0 = vector.load %arg8[%c0, %c0_0] : memref<1x648xf32, #tpu.memory_space<vmem>>, vector<1x648xf32>
    %c0_1 = arith.constant 0 : index
    %c19 = arith.constant 19 : index
    %1 = vector.load %arg1[%c0_1, %c19] : memref<8x686xf32, #tpu.memory_space<vmem>>, vector<8x648xf32>
    %c0_2 = arith.constant 0 : index
    %c0_3 = arith.constant 0 : index
    %2 = vector.load %arg1[%c0_2, %c0_3] : memref<8x686xf32, #tpu.memory_space<vmem>>, vector<8x648xf32>
    %c0_4 = arith.constant 0 : index
    %c1 = arith.constant 1 : index
    %3 = vector.load %arg1[%c0_4, %c1] : memref<8x686xf32, #tpu.memory_space<vmem>>, vector<8x648xf32>
    %c0_5 = arith.constant 0 : index
    %c2 = arith.constant 2 : index
    %4 = vector.load %arg1[%c0_5, %c2] : memref<8x686xf32, #tpu.memory_space<vmem>>, vector<8x648xf32>
    %c0_6 = arith.constant 0 : index
    %c18 = arith.constant 18 : index
    %5 = vector.load %arg1[%c0_6, %c18] : memref<8x686xf32, #tpu.memory_space<vmem>>, vector<8x648xf32>
    %c0_7 = arith.constant 0 : index
    %c19_8 = arith.constant 19 : index
    %6 = vector.load %arg1[%c0_7, %c19_8] : memref<8x686xf32, #tpu.memory_space<vmem>>, vector<8x648xf32>
    %c0_9 = arith.constant 0 : index
    %c20 = arith.constant 20 : index
    %7 = vector.load %arg1[%c0_9, %c20] : memref<8x686xf32, #tpu.memory_space<vmem>>, vector<8x648xf32>
    %c0_10 = arith.constant 0 : index
    %c36 = arith.constant 36 : index
    %8 = vector.load %arg1[%c0_10, %c36] : memref<8x686xf32, #tpu.memory_space<vmem>>, vector<8x648xf32>
    %c0_11 = arith.constant 0 : index
    %c37 = arith.constant 37 : index
    %9 = vector.load %arg1[%c0_11, %c37] : memref<8x686xf32, #tpu.memory_space<vmem>>, vector<8x648xf32>
    %c0_12 = arith.constant 0 : index
    %c38 = arith.constant 38 : index
    %10 = vector.load %arg1[%c0_12, %c38] : memref<8x686xf32, #tpu.memory_space<vmem>>, vector<8x648xf32>
    %11 = tpu.concatenate %2, %3, %4, %5, %6, %7, %8, %9, %10 in 0 : vector<8x648xf32>, vector<8x648xf32>, vector<8x648xf32>, vector<8x648xf32>, vector<8x648xf32>, vector<8x648xf32>, vector<8x648xf32>, vector<8x648xf32>, vector<8x648xf32> -> vector<72x648xf32>
    %c0_13 = arith.constant 0 : index
    %c0_14 = arith.constant 0 : index
    %12 = vector.load %arg2[%c0_13, %c0_14] : memref<8x72xf32, #tpu.memory_space<vmem>>, vector<8x72xf32>
    %cst = arith.constant dense<0.000000e+00> : vector<8x648xf32>
    %13 = tpu.matmul %12, %11, %cst {dimension_numbers = #tpu.dot_dimension_numbers<[1], [0], [0], [1], [0, 0, 1, 1], [], []>} : vector<8x72xf32>, vector<72x648xf32>, vector<8x648xf32> -> vector<8x648xf32>
    %14 = vector.broadcast %0 : vector<1x648xf32> to vector<8x648xf32>
    %15 = arith.mulf %13, %14 : vector<8x648xf32>
    %cst_15 = arith.constant dense<0.000000e+00> : vector<8xf32>
    %16 = vector.multi_reduction <add>, %15, %cst_15 [1] : vector<8x648xf32> to vector<8xf32>
    %17 = vector.shape_cast %16 : vector<8xf32> to vector<8x1xf32>
    %cst_16 = arith.constant 0.001953125 : f32
    %18 = vector.broadcast %cst_16 : f32 to vector<8x1xf32>
    %19 = arith.mulf %17, %18 : vector<8x1xf32>
    %20 = vector.broadcast %19 : vector<8x1xf32> to vector<8x648xf32>
    %21 = arith.subf %13, %20 : vector<8x648xf32>
    %22 = vector.broadcast %0 : vector<1x648xf32> to vector<8x648xf32>
    %23 = arith.mulf %21, %22 : vector<8x648xf32>
    %24 = arith.mulf %23, %23 : vector<8x648xf32>
    %cst_17 = arith.constant dense<0.000000e+00> : vector<8xf32>
    %25 = vector.multi_reduction <add>, %24, %cst_17 [1] : vector<8x648xf32> to vector<8xf32>
    %26 = vector.shape_cast %25 : vector<8xf32> to vector<8x1xf32>
    %cst_18 = arith.constant 0.001953125 : f32
    %27 = vector.broadcast %cst_18 : f32 to vector<8x1xf32>
    %28 = arith.mulf %26, %27 : vector<8x1xf32>
    %29 = vector.broadcast %19 : vector<8x1xf32> to vector<8x648xf32>
    %30 = arith.subf %13, %29 : vector<8x648xf32>
    %cst_19 = arith.constant 9.99999974E-6 : f32
    %31 = vector.broadcast %cst_19 : f32 to vector<8x1xf32>
    %32 = arith.addf %28, %31 : vector<8x1xf32>
    %33 = math.rsqrt %32 : vector<8x1xf32>
    %34 = vector.broadcast %33 : vector<8x1xf32> to vector<8x648xf32>
    %35 = arith.mulf %30, %34 : vector<8x648xf32>
    %c0_20 = arith.constant 0 : index
    %c0_21 = arith.constant 0 : index
    %36 = vector.load %arg4[%c0_20, %c0_21] : memref<8x1xf32, #tpu.memory_space<vmem>>, vector<8x1xf32>
    %37 = vector.broadcast %36 : vector<8x1xf32> to vector<8x648xf32>
    %38 = arith.mulf %35, %37 : vector<8x648xf32>
    %c0_22 = arith.constant 0 : index
    %c0_23 = arith.constant 0 : index
    %39 = vector.load %arg5[%c0_22, %c0_23] : memref<8x1xf32, #tpu.memory_space<vmem>>, vector<8x1xf32>
    %40 = vector.broadcast %39 : vector<8x1xf32> to vector<8x648xf32>
    %41 = arith.addf %38, %40 : vector<8x648xf32>
    %cst_24 = arith.constant 0.000000e+00 : f32
    %42 = vector.broadcast %cst_24 : f32 to vector<8x648xf32>
    %43 = arith.maximumf %41, %42 : vector<8x648xf32>
    %44 = vector.broadcast %0 : vector<1x648xf32> to vector<8x648xf32>
    %45 = arith.mulf %43, %44 : vector<8x648xf32>
    %cst_25 = arith.constant 0.000000e+00 : f32
    %46 = vector.broadcast %cst_25 : f32 to vector<8x19xf32>
    %47 = tpu.concatenate %46, %45, %46 in 1 : vector<8x19xf32>, vector<8x648xf32>, vector<8x19xf32> -> vector<8x686xf32>
    %c0_26 = arith.constant 0 : index
    %c0_27 = arith.constant 0 : index
    %48 = vector.load %arg10[%c0_26, %c0_27] : memref<8x686xf32, #tpu.memory_space<vmem>>, vector<8x686xf32>
    tpu.vector_store %arg10[%c0_26, %c0_27], %47 {strides = array<i32>} : memref<8x686xf32, #tpu.memory_space<vmem>>, vector<8x686xf32>,
    %c0_28 = arith.constant 0 : index
    %c0_29 = arith.constant 0 : index
    %49 = vector.load %arg10[%c0_28, %c0_29] : memref<8x686xf32, #tpu.memory_space<vmem>>, vector<8x648xf32>
    %c0_30 = arith.constant 0 : index
    %c1_31 = arith.constant 1 : index
    %50 = vector.load %arg10[%c0_30, %c1_31] : memref<8x686xf32, #tpu.memory_space<vmem>>, vector<8x648xf32>
    %c0_32 = arith.constant 0 : index
    %c2_33 = arith.constant 2 : index
    %51 = vector.load %arg10[%c0_32, %c2_33] : memref<8x686xf32, #tpu.memory_space<vmem>>, vector<8x648xf32>
    %c0_34 = arith.constant 0 : index
    %c18_35 = arith.constant 18 : index
    %52 = vector.load %arg10[%c0_34, %c18_35] : memref<8x686xf32, #tpu.memory_space<vmem>>, vector<8x648xf32>
    %c0_36 = arith.constant 0 : index
    %c19_37 = arith.constant 19 : index
    %53 = vector.load %arg10[%c0_36, %c19_37] : memref<8x686xf32, #tpu.memory_space<vmem>>, vector<8x648xf32>
    %c0_38 = arith.constant 0 : index
    %c20_39 = arith.constant 20 : index
    %54 = vector.load %arg10[%c0_38, %c20_39] : memref<8x686xf32, #tpu.memory_space<vmem>>, vector<8x648xf32>
    %c0_40 = arith.constant 0 : index
    %c36_41 = arith.constant 36 : index
    %55 = vector.load %arg10[%c0_40, %c36_41] : memref<8x686xf32, #tpu.memory_space<vmem>>, vector<8x648xf32>
    %c0_42 = arith.constant 0 : index
    %c37_43 = arith.constant 37 : index
    %56 = vector.load %arg10[%c0_42, %c37_43] : memref<8x686xf32, #tpu.memory_space<vmem>>, vector<8x648xf32>
    %c0_44 = arith.constant 0 : index
    %c38_45 = arith.constant 38 : index
    %57 = vector.load %arg10[%c0_44, %c38_45] : memref<8x686xf32, #tpu.memory_space<vmem>>, vector<8x648xf32>
    %58 = tpu.concatenate %49, %50, %51, %52, %53, %54, %55, %56, %57 in 0 : vector<8x648xf32>, vector<8x648xf32>, vector<8x648xf32>, vector<8x648xf32>, vector<8x648xf32>, vector<8x648xf32>, vector<8x648xf32>, vector<8x648xf32>, vector<8x648xf32> -> vector<72x648xf32>
    %c0_46 = arith.constant 0 : index
    %c0_47 = arith.constant 0 : index
    %59 = vector.load %arg3[%c0_46, %c0_47] : memref<8x72xf32, #tpu.memory_space<vmem>>, vector<8x72xf32>
    %cst_48 = arith.constant dense<0.000000e+00> : vector<8x648xf32>
    %60 = tpu.matmul %59, %58, %cst_48 {dimension_numbers = #tpu.dot_dimension_numbers<[1], [0], [0], [1], [0, 0, 1, 1], [], []>} : vector<8x72xf32>, vector<72x648xf32>, vector<8x648xf32> -> vector<8x648xf32>
    %61 = vector.broadcast %0 : vector<1x648xf32> to vector<8x648xf32>
    %62 = arith.mulf %60, %61 : vector<8x648xf32>
    %cst_49 = arith.constant dense<0.000000e+00> : vector<8xf32>
    %63 = vector.multi_reduction <add>, %62, %cst_49 [1] : vector<8x648xf32> to vector<8xf32>
    %64 = vector.shape_cast %63 : vector<8xf32> to vector<8x1xf32>
    %cst_50 = arith.constant 0.001953125 : f32
    %65 = vector.broadcast %cst_50 : f32 to vector<8x1xf32>
    %66 = arith.mulf %64, %65 : vector<8x1xf32>
    %67 = vector.broadcast %66 : vector<8x1xf32> to vector<8x648xf32>
    %68 = arith.subf %60, %67 : vector<8x648xf32>
    %69 = vector.broadcast %0 : vector<1x648xf32> to vector<8x648xf32>
    %70 = arith.mulf %68, %69 : vector<8x648xf32>
    %71 = arith.mulf %70, %70 : vector<8x648xf32>
    %cst_51 = arith.constant dense<0.000000e+00> : vector<8xf32>
    %72 = vector.multi_reduction <add>, %71, %cst_51 [1] : vector<8x648xf32> to vector<8xf32>
    %73 = vector.shape_cast %72 : vector<8xf32> to vector<8x1xf32>
    %cst_52 = arith.constant 0.001953125 : f32
    %74 = vector.broadcast %cst_52 : f32 to vector<8x1xf32>
    %75 = arith.mulf %73, %74 : vector<8x1xf32>
    %76 = vector.broadcast %66 : vector<8x1xf32> to vector<8x648xf32>
    %77 = arith.subf %60, %76 : vector<8x648xf32>
    %cst_53 = arith.constant 9.99999974E-6 : f32
    %78 = vector.broadcast %cst_53 : f32 to vector<8x1xf32>
    %79 = arith.addf %75, %78 : vector<8x1xf32>
    %80 = math.rsqrt %79 : vector<8x1xf32>
    %81 = vector.broadcast %80 : vector<8x1xf32> to vector<8x648xf32>
    %82 = arith.mulf %77, %81 : vector<8x648xf32>
    %c0_54 = arith.constant 0 : index
    %c0_55 = arith.constant 0 : index
    %83 = vector.load %arg6[%c0_54, %c0_55] : memref<8x1xf32, #tpu.memory_space<vmem>>, vector<8x1xf32>
    %84 = vector.broadcast %83 : vector<8x1xf32> to vector<8x648xf32>
    %85 = arith.mulf %82, %84 : vector<8x648xf32>
    %c0_56 = arith.constant 0 : index
    %c0_57 = arith.constant 0 : index
    %86 = vector.load %arg7[%c0_56, %c0_57] : memref<8x1xf32, #tpu.memory_space<vmem>>, vector<8x1xf32>
    %87 = vector.broadcast %86 : vector<8x1xf32> to vector<8x648xf32>
    %88 = arith.addf %85, %87 : vector<8x648xf32>
    %89 = arith.addf %88, %1 : vector<8x648xf32>
    %cst_58 = arith.constant 0.000000e+00 : f32
    %90 = vector.broadcast %cst_58 : f32 to vector<8x648xf32>
    %91 = arith.maximumf %89, %90 : vector<8x648xf32>
    %92 = vector.broadcast %0 : vector<1x648xf32> to vector<8x648xf32>
    %93 = arith.mulf %91, %92 : vector<8x648xf32>
    %c0_59 = arith.constant 0 : index
    %c0_60 = arith.constant 0 : index
    %94 = vector.load %arg9[%c0_59, %c0_60] : memref<8x648xf32, #tpu.memory_space<vmem>>, vector<8x648xf32>
    tpu.vector_store %arg9[%c0_59, %c0_60], %93 {strides = array<i32>} : memref<8x648xf32, #tpu.memory_space<vmem>>, vector<8x648xf32>,
    return
  }
  func.func @transform_0(%arg0: i32) -> (i32, i32) {
    %c0_i32 = arith.constant 0 : i32
    %c0_i32_0 = arith.constant 0 : i32
    %c0_i32_1 = arith.constant 0 : i32
    return %c0_i32, %c0_i32_0 : i32, i32
  }
  func.func @transform_1(%arg0: i32) -> (i32, i32) {
    %c0_i32 = arith.constant 0 : i32
    %c0_i32_0 = arith.constant 0 : i32
    %c0_i32_1 = arith.constant 0 : i32
    return %c0_i32, %c0_i32_0 : i32, i32
  }
  func.func @transform_2(%arg0: i32) -> (i32, i32) {
    %c0_i32 = arith.constant 0 : i32
    %c0_i32_0 = arith.constant 0 : i32
    %c0_i32_1 = arith.constant 0 : i32
    return %c0_i32, %c0_i32_0 : i32, i32
  }
  func.func @transform_3(%arg0: i32) -> (i32, i32) {
    %c0_i32 = arith.constant 0 : i32
    %c0_i32_0 = arith.constant 0 : i32
    %c0_i32_1 = arith.constant 0 : i32
    return %c0_i32, %c0_i32_0 : i32, i32
  }
  func.func @transform_4(%arg0: i32) -> (i32, i32) {
    %c0_i32 = arith.constant 0 : i32
    %c0_i32_0 = arith.constant 0 : i32
    %c0_i32_1 = arith.constant 0 : i32
    return %c0_i32, %c0_i32_0 : i32, i32
  }
  func.func @transform_5(%arg0: i32) -> (i32, i32) {
    %c0_i32 = arith.constant 0 : i32
    %c0_i32_0 = arith.constant 0 : i32
    %c0_i32_1 = arith.constant 0 : i32
    return %c0_i32, %c0_i32_0 : i32, i32
  }
  func.func @transform_6(%arg0: i32) -> (i32, i32) {
    %c0_i32 = arith.constant 0 : i32
    %c0_i32_0 = arith.constant 0 : i32
    %c0_i32_1 = arith.constant 0 : i32
    return %c0_i32, %c0_i32_0 : i32, i32
  }
  func.func @transform_7(%arg0: i32) -> (i32, i32) {
    %c0_i32 = arith.constant 0 : i32
    %c0_i32_0 = arith.constant 0 : i32
    %c0_i32_1 = arith.constant 0 : i32
    return %c0_i32, %c0_i32_0 : i32, i32
  }
  func.func @transform_8(%arg0: i32) -> (i32, i32) {
    %c0_i32 = arith.constant 0 : i32
    %c0_i32_0 = arith.constant 0 : i32
    %c0_i32_1 = arith.constant 0 : i32
    return %c0_i32, %c0_i32_0 : i32, i32
  }
}

</mosaic_0001>

<llo_original>
// kernel: tpu_custom_call.1
$region0: #{tpu_custom_call.1}
  #allocation0 [shape = 'u32[]', space=smem, size = 0x4, offset = 0x4, fixed_abs, tag = 'smem constant byte address 0x4 - core index']
  #allocation1 [shape = 'u32[72,128]{1,0:T(1,128)}', space=vmem, size = 0x9000, scoped, tag = 'internal scratch']
  #allocation2 [shape = 'f32[8,686]{1,0:T(8,128)}', space=vmem, size = 0x6000, scoped, tag = 'scratch operand']
  %s0 = inlined_call_operand.hbm [shape: f32[8,686], index: 0, kind: input, shape index: {}]
  %s1 = inlined_call_operand.vmem [shape: f32[8,72], index: 1, kind: input, shape index: {}]
  %s2 = inlined_call_operand.vmem [shape: f32[8,72], index: 2, kind: input, shape index: {}]
  %s3 = inlined_call_operand.vmem [shape: f32[8,1], index: 3, kind: input, shape index: {}]
  %s4 = inlined_call_operand.vmem [shape: f32[8,1], index: 4, kind: input, shape index: {}]
  %s5 = inlined_call_operand.vmem [shape: f32[8,1], index: 5, kind: input, shape index: {}]
  %s6 = inlined_call_operand.vmem [shape: f32[8,1], index: 6, kind: input, shape index: {}]
  %s7 = inlined_call_operand.vmem [shape: f32[1,648], index: 7, kind: input, shape index: {}]
  %s8 = inlined_call_operand.hbm [shape: f32[8,648], index: 8, kind: output, shape index: {}]
  %s9 = sld [smem:[#allocation0]]
  $region46: #{tpu_custom_call.1} parent=0
    _
  %s11 = ssub.s32 1, %s9
  %s12 = scalar_select 0, %s11, %s9
  $region1: #{tpu_custom_call.1} parent=0
    #allocation3 [shape = 'u8[24576]{0}', space=vmem, size = 0x6000, scoped, tag = 'input window, operand 0, single buffered']
    #allocation4 [shape = 's32[1]{0}', space=sflag, size = 0x4, scoped, tag = 'scoped memory for tpu_custom_call.1']
    #allocation5 [shape = 's32[1]{0}', space=sflag, size = 0x4, scoped, tag = 'scoped memory for tpu_custom_call.1']
    #allocation6 [shape = 'u8[24576]{0}', space=vmem, size = 0x6000, scoped, tag = 'output window, operand 0, single buffered']
    %13 = vsyncpa [#allocation4], 0
    %14 = vsyncpa [#allocation5], 0
    // Predicated region
    $region2: #{tpu_custom_call.1} parent=1 // pred_check
      _
    $region3: #{tpu_custom_call.1} parent=1 // pred_check_branch
      %16 = sbr.rel (0) target = $region5
    $region4: #{tpu_custom_call.1} parent=1 // pred_region
      %18 = vsyncadd [#allocation4], 0
      %s20 = sshll.u32 %s0, 4
      %s21 = int_to_ptr.hbm [resolvable:$true] %s20
      %s22 = sshll.u32 [#allocation3], 4
      %s23 = int_to_ptr.vmem [resolvable:$true] %s22
      %25 = dma.hbm_to_vmem [thread:$0]  %s21, 768, %s23, [#allocation4]
    $region5: #{tpu_custom_call.1} parent=1 // pred_fallthru
      _
    // Predicated region
    $region6: #{tpu_custom_call.1} parent=1 // pred_check
      _
    $region7: #{tpu_custom_call.1} parent=1 // pred_check_branch
      %27 = sbr.rel (0) target = $region9
    $region8: #{tpu_custom_call.1} parent=1 // pred_region
      _
    $region9: #{tpu_custom_call.1} parent=1 // pred_fallthru
      _
    // Predicated region
    $region10: #{tpu_custom_call.1} parent=1 // pred_check
      _
    $region11: #{tpu_custom_call.1} parent=1 // pred_check_branch
      %29 = sbr.rel (0) target = $region13
    $region12: #{tpu_custom_call.1} parent=1 // pred_region
      _
    $region13: #{tpu_custom_call.1} parent=1 // pred_fallthru
      _
    // Predicated region
    $region14: #{tpu_custom_call.1} parent=1 // pred_check
      _
    $region15: #{tpu_custom_call.1} parent=1 // pred_check_branch
      %31 = sbr.rel (0) target = $region17
    $region16: #{tpu_custom_call.1} parent=1 // pred_region
      _
    $region17: #{tpu_custom_call.1} parent=1 // pred_fallthru
      _
    // Predicated region
    $region18: #{tpu_custom_call.1} parent=1 // pred_check
      _
    $region19: #{tpu_custom_call.1} parent=1 // pred_check_branch
      %33 = sbr.rel (0) target = $region21
    $region20: #{tpu_custom_call.1} parent=1 // pred_region
      _
    $region21: #{tpu_custom_call.1} parent=1 // pred_fallthru
      _
    // Predicated region
    $region22: #{tpu_custom_call.1} parent=1 // pred_check
      _
    $region23: #{tpu_custom_call.1} parent=1 // pred_check_branch
      %35 = sbr.rel (0) target = $region25
    $region24: #{tpu_custom_call.1} parent=1 // pred_region
      _
    $region25: #{tpu_custom_call.1} parent=1 // pred_fallthru
      _
    // Predicated region
    $region26: #{tpu_custom_call.1} parent=1 // pred_check
      _
    $region27: #{tpu_custom_call.1} parent=1 // pred_check_branch
      %37 = sbr.rel (0) target = $region29
    $region28: #{tpu_custom_call.1} parent=1 // pred_region
      _
    $region29: #{tpu_custom_call.1} parent=1 // pred_fallthru
      _
    // Predicated region
    $region30: #{tpu_custom_call.1} parent=1 // pred_check
      _
    $region31: #{tpu_custom_call.1} parent=1 // pred_check_branch
      %39 = sbr.rel (0) target = $region33
    $region32: #{tpu_custom_call.1} parent=1 // pred_region
      _
    $region33: #{tpu_custom_call.1} parent=1 // pred_fallthru
      _
    // Predicated region
    $region34: #{tpu_custom_call.1} parent=1 // pred_check
      _
    $region35: #{tpu_custom_call.1} parent=1 // pred_check_branch
      %41 = sbr.rel (0) target = $region37
    $region36: #{tpu_custom_call.1} parent=1 // pred_region
      %43 = dma.done [#allocation4], 768
    $region37: #{tpu_custom_call.1} parent=1 // pred_fallthru
      _
    %v44 = vld [vmem:[%s7] sm:$0x3f]
    %v45 = vld [vmem:[#allocation3] sm:$0xff]
    %v46 = vld [vmem:[#allocation3 + $0x8] sm:$0xff]
    %v47 = vld [vmem:[#allocation3 + $0x10] sm:$0xff]
    %v48 = vld [vmem:[#allocation3 + $0x18] sm:$0xff]
    %v49 = vld [vmem:[#allocation3 + $0x20] sm:$0xff]
    %v50 = vld [vmem:[#allocation3 + $0x28] sm:$0xff]
    %57 = vrot.lane.b32.xlu0 %v45, 127
    %v58 = vpop.permute.xlu0 %57
    %59 = vrot.lane.b32.xlu0 %v46, 127
    %v60 = vpop.permute.xlu0 %59
    %61 = vrot.lane.b32.xlu0 %v47, 127
    %v62 = vpop.permute.xlu0 %61
    %63 = vrot.lane.b32.xlu0 %v48, 127
    %v64 = vpop.permute.xlu0 %63
    %65 = vrot.lane.b32.xlu0 %v49, 127
    %v66 = vpop.permute.xlu0 %65
    %67 = vrot.lane.b32.xlu0 %v50, 127
    %v68 = vpop.permute.xlu0 %67
    %vm69 = vcmask 1039360
    %v70 = vsel %vm69, %v58, %v60
    %v71 = vsel %vm69, %v60, %v62
    %v72 = vsel %vm69, %v62, %v64
    %v73 = vsel %vm69, %v64, %v66
    %v74 = vsel %vm69, %v66, %v68
    %81 = vrot.lane.b32.xlu0 %v45, 126
    %v82 = vpop.permute.xlu0 %81
    %83 = vrot.lane.b32.xlu0 %v46, 126
    %v84 = vpop.permute.xlu0 %83
    %85 = vrot.lane.b32.xlu0 %v47, 126
    %v86 = vpop.permute.xlu0 %85
    %87 = vrot.lane.b32.xlu0 %v48, 126
    %v88 = vpop.permute.xlu0 %87
    %89 = vrot.lane.b32.xlu0 %v49, 126
    %v90 = vpop.permute.xlu0 %89
    %91 = vrot.lane.b32.xlu0 %v50, 126
    %v92 = vpop.permute.xlu0 %91
    %vm93 = vcmask 1031168
    %v94 = vsel %vm93, %v82, %v84
    %v95 = vsel %vm93, %v84, %v86
    %v96 = vsel %vm93, %v86, %v88
    %v97 = vsel %vm93, %v88, %v90
    %v98 = vsel %vm93, %v90, %v92
    %105 = vrot.lane.b32.xlu0 %v45, 110
    %v106 = vpop.permute.xlu0 %105
    %107 = vrot.lane.b32.xlu0 %v46, 110
    %v108 = vpop.permute.xlu0 %107
    %109 = vrot.lane.b32.xlu0 %v47, 110
    %v110 = vpop.permute.xlu0 %109
    %111 = vrot.lane.b32.xlu0 %v48, 110
    %v112 = vpop.permute.xlu0 %111
    %113 = vrot.lane.b32.xlu0 %v49, 110
    %v114 = vpop.permute.xlu0 %113
    %115 = vrot.lane.b32.xlu0 %v50, 110
    %v116 = vpop.permute.xlu0 %115
    %vm117 = vcmask 900096
    %v118 = vsel %vm117, %v106, %v108
    %v119 = vsel %vm117, %v108, %v110
    %v120 = vsel %vm117, %v110, %v112
    %v121 = vsel %vm117, %v112, %v114
    %v122 = vsel %vm117, %v114, %v116
    %129 = vrot.lane.b32.xlu0 %v45, 109
    %v130 = vpop.permute.xlu0 %129
    %131 = vrot.lane.b32.xlu0 %v46, 109
    %v132 = vpop.permute.xlu0 %131
    %133 = vrot.lane.b32.xlu0 %v47, 109
    %v134 = vpop.permute.xlu0 %133
    %135 = vrot.lane.b32.xlu0 %v48, 109
    %v136 = vpop.permute.xlu0 %135
    %137 = vrot.lane.b32.xlu0 %v49, 109
    %v138 = vpop.permute.xlu0 %137
    %139 = vrot.lane.b32.xlu0 %v50, 109
    %v140 = vpop.permute.xlu0 %139
    %vm141 = vcmask 891904
    %v142 = vsel %vm141, %v130, %v132
    %v143 = vsel %vm141, %v132, %v134
    %v144 = vsel %vm141, %v134, %v136
    %v145 = vsel %vm141, %v136, %v138
    %v146 = vsel %vm141, %v138, %v140
    %153 = vrot.lane.b32.xlu0 %v45, 108
    %v154 = vpop.permute.xlu0 %153
    %155 = vrot.lane.b32.xlu0 %v46, 108
    %v156 = vpop.permute.xlu0 %155
    %157 = vrot.lane.b32.xlu0 %v47, 108
    %v158 = vpop.permute.xlu0 %157
    %159 = vrot.lane.b32.xlu0 %v48, 108
    %v160 = vpop.permute.xlu0 %159
    %161 = vrot.lane.b32.xlu0 %v49, 108
    %v162 = vpop.permute.xlu0 %161
    %163 = vrot.lane.b32.xlu0 %v50, 108
    %v164 = vpop.permute.xlu0 %163
    %vm165 = vcmask 883712
    %v166 = vsel %vm165, %v154, %v156
    %v167 = vsel %vm165, %v156, %v158
    %v168 = vsel %vm165, %v158, %v160
    %v169 = vsel %vm165, %v160, %v162
    %v170 = vsel %vm165, %v162, %v164
    %177 = vrot.lane.b32.xlu0 %v45, 92
    %v178 = vpop.permute.xlu0 %177
    %179 = vrot.lane.b32.xlu0 %v46, 92
    %v180 = vpop.permute.xlu0 %179
    %181 = vrot.lane.b32.xlu0 %v47, 92
    %v182 = vpop.permute.xlu0 %181
    %183 = vrot.lane.b32.xlu0 %v48, 92
    %v184 = vpop.permute.xlu0 %183
    %185 = vrot.lane.b32.xlu0 %v49, 92
    %v186 = vpop.permute.xlu0 %185
    %187 = vrot.lane.b32.xlu0 %v50, 92
    %v188 = vpop.permute.xlu0 %187
    %vm189 = vcmask 752640
    %v190 = vsel %vm189, %v178, %v180
    %v191 = vsel %vm189, %v180, %v182
    %v192 = vsel %vm189, %v182, %v184
    %v193 = vsel %vm189, %v184, %v186
    %v194 = vsel %vm189, %v186, %v188
    %201 = vrot.lane.b32.xlu0 %v45, 91
    %v202 = vpop.permute.xlu0 %201
    %203 = vrot.lane.b32.xlu0 %v46, 91
    %v204 = vpop.permute.xlu0 %203
    %205 = vrot.lane.b32.xlu0 %v47, 91
    %v206 = vpop.permute.xlu0 %205
    %207 = vrot.lane.b32.xlu0 %v48, 91
    %v208 = vpop.permute.xlu0 %207
    %209 = vrot.lane.b32.xlu0 %v49, 91
    %v210 = vpop.permute.xlu0 %209
    %211 = vrot.lane.b32.xlu0 %v50, 91
    %v212 = vpop.permute.xlu0 %211
    %vm213 = vcmask 744448
    %v214 = vsel %vm213, %v202, %v204
    %v215 = vsel %vm213, %v204, %v206
    %v216 = vsel %vm213, %v206, %v208
    %v217 = vsel %vm213, %v208, %v210
    %v218 = vsel %vm213, %v210, %v212
    %225 = vrot.lane.b32.xlu0 %v45, 90
    %v226 = vpop.permute.xlu0 %225
    %227 = vrot.lane.b32.xlu0 %v46, 90
    %v228 = vpop.permute.xlu0 %227
    %229 = vrot.lane.b32.xlu0 %v47, 90
    %v230 = vpop.permute.xlu0 %229
    %231 = vrot.lane.b32.xlu0 %v48, 90
    %v232 = vpop.permute.xlu0 %231
    %233 = vrot.lane.b32.xlu0 %v49, 90
    %v234 = vpop.permute.xlu0 %233
    %235 = vrot.lane.b32.xlu0 %v50, 90
    %v236 = vpop.permute.xlu0 %235
    %vm237 = vcmask 736256
    %v238 = vsel %vm237, %v226, %v228
    %v239 = vsel %vm237, %v228, %v230
    %v240 = vsel %vm237, %v230, %v232
    %v241 = vsel %vm237, %v232, %v234
    %v242 = vsel %vm237, %v234, %v236
    %v249 = vld [vmem:[%s1] sm:$0xff]
    %vm250 = vcmask 588800
    %v252 = vsel %vm250, %v249, 0
    %254 = vmatpush.msra.mxu0 0.0
    %255 = vmatpush.msra.mxu0 0.0
    %256 = vmatpush.msra.mxu0 0.0
    %257 = vmatpush.msra.mxu0 0.0
    %258 = vmatpush.msra.mxu0 0.0
    %259 = vmatpush.msra.mxu0 0.0
    %260 = vmatpush.msra.mxu0 0.0
    %261 = vmatpush.msra.mxu0 %v238
    %262 = vmatpush.msra.mxu0 %v214
    %263 = vmatpush.msra.mxu0 %v190
    %264 = vmatpush.msra.mxu0 %v166
    %265 = vmatpush.msra.mxu0 %v142
    %266 = vmatpush.msra.mxu0 %v118
    %267 = vmatpush.msra.mxu0 %v94
    %268 = vmatpush.msra.mxu0 %v70
    %269 = vmatpush.msra.mxu0 %v45
    %270 = vmatmul.f32.gmra.mxu0 %v252
    %v271 = vpop.f32.mrf.mxu0
    %v272 = vadd.f32 0.0, %v271
    %273 = vdwg.mxu0
    %274 = vmatpush.msra.mxu0 0.0
    %275 = vmatpush.msra.mxu0 0.0
    %276 = vmatpush.msra.mxu0 0.0
    %277 = vmatpush.msra.mxu0 0.0
    %278 = vmatpush.msra.mxu0 0.0
    %279 = vmatpush.msra.mxu0 0.0
    %280 = vmatpush.msra.mxu0 0.0
    %281 = vmatpush.msra.mxu0 %v239
    %282 = vmatpush.msra.mxu0 %v215
    %283 = vmatpush.msra.mxu0 %v191
    %284 = vmatpush.msra.mxu0 %v167
    %285 = vmatpush.msra.mxu0 %v143
    %286 = vmatpush.msra.mxu0 %v119
    %287 = vmatpush.msra.mxu0 %v95
    %288 = vmatpush.msra.mxu0 %v71
    %289 = vmatpush.msra.mxu0 %v46
    %290 = vmatmul.f32.gmra.mxu0 %v252
    %v291 = vpop.f32.mrf.mxu0
    %v292 = vadd.f32 0.0, %v291
    %293 = vdwg.mxu0
    %294 = vmatpush.msra.mxu0 0.0
    %295 = vmatpush.msra.mxu0 0.0
    %296 = vmatpush.msra.mxu0 0.0
    %297 = vmatpush.msra.mxu0 0.0
    %298 = vmatpush.msra.mxu0 0.0
    %299 = vmatpush.msra.mxu0 0.0
    %300 = vmatpush.msra.mxu0 0.0
    %301 = vmatpush.msra.mxu0 %v240
    %302 = vmatpush.msra.mxu0 %v216
    %303 = vmatpush.msra.mxu0 %v192
    %304 = vmatpush.msra.mxu0 %v168
    %305 = vmatpush.msra.mxu0 %v144
    %306 = vmatpush.msra.mxu0 %v120
    %307 = vmatpush.msra.mxu0 %v96
    %308 = vmatpush.msra.mxu0 %v72
    %309 = vmatpush.msra.mxu0 %v47
    %310 = vmatmul.f32.gmra.mxu0 %v252
    %v311 = vpop.f32.mrf.mxu0
    %v312 = vadd.f32 0.0, %v311
    %313 = vdwg.mxu0
    %314 = vmatpush.msra.mxu0 0.0
    %315 = vmatpush.msra.mxu0 0.0
    %316 = vmatpush.msra.mxu0 0.0
    %317 = vmatpush.msra.mxu0 0.0
    %318 = vmatpush.msra.mxu0 0.0
    %319 = vmatpush.msra.mxu0 0.0
    %320 = vmatpush.msra.mxu0 0.0
    %321 = vmatpush.msra.mxu0 %v241
    %322 = vmatpush.msra.mxu0 %v217
    %323 = vmatpush.msra.mxu0 %v193
    %324 = vmatpush.msra.mxu0 %v169
    %325 = vmatpush.msra.mxu0 %v145
    %326 = vmatpush.msra.mxu0 %v121
    %327 = vmatpush.msra.mxu0 %v97
    %328 = vmatpush.msra.mxu0 %v73
    %329 = vmatpush.msra.mxu0 %v48
    %330 = vmatmul.f32.gmra.mxu0 %v252
    %v331 = vpop.f32.mrf.mxu0
    %v332 = vadd.f32 0.0, %v331
    %333 = vdwg.mxu0
    %334 = vmatpush.msra.mxu0 0.0
    %335 = vmatpush.msra.mxu0 0.0
    %336 = vmatpush.msra.mxu0 0.0
    %337 = vmatpush.msra.mxu0 0.0
    %338 = vmatpush.msra.mxu0 0.0
    %339 = vmatpush.msra.mxu0 0.0
    %340 = vmatpush.msra.mxu0 0.0
    %341 = vmatpush.msra.mxu0 %v242
    %342 = vmatpush.msra.mxu0 %v218
    %343 = vmatpush.msra.mxu0 %v194
    %344 = vmatpush.msra.mxu0 %v170
    %345 = vmatpush.msra.mxu0 %v146
    %346 = vmatpush.msra.mxu0 %v122
    %347 = vmatpush.msra.mxu0 %v98
    %348 = vmatpush.msra.mxu0 %v74
    %349 = vmatpush.msra.mxu0 %v49
    %350 = vmatmul.f32.gmra.mxu0 %v252
    %v351 = vpop.f32.mrf.mxu0
    %v352 = vadd.f32 0.0, %v351
    %353 = vdwg.mxu0
    %354 = vmatpush.msra.mxu0 0.0
    %355 = vmatpush.msra.mxu0 0.0
    %356 = vmatpush.msra.mxu0 0.0
    %357 = vmatpush.msra.mxu0 0.0
    %358 = vmatpush.msra.mxu0 0.0
    %359 = vmatpush.msra.mxu0 0.0
    %360 = vmatpush.msra.mxu0 0.0
    %361 = vmatpush.msra.mxu0 %v236
    %362 = vmatpush.msra.mxu0 %v212
    %363 = vmatpush.msra.mxu0 %v188
    %364 = vmatpush.msra.mxu0 %v164
    %365 = vmatpush.msra.mxu0 %v140
    %366 = vmatpush.msra.mxu0 %v116
    %367 = vmatpush.msra.mxu0 %v92
    %368 = vmatpush.msra.mxu0 %v68
    %369 = vmatpush.msra.mxu0 %v50
    %370 = vmatmul.f32.gmra.mxu0 %v252
    %v371 = vpop.f32.mrf.mxu0
    %v372 = vadd.f32 0.0, %v371
    %373 = vdwg.mxu0
    %v375 = vperm.slane %v44, 0
    %v376 = vperm.slane %v44, 1
    %v377 = vperm.slane %v44, 2
    %v378 = vperm.slane %v44, 3
    %v379 = vperm.slane %v44, 4
    %v380 = vperm.slane %v44, 5
    %v387 = vmul.f32 %v272, %v375
    %v388 = vmul.f32 %v292, %v376
    %v389 = vmul.f32 %v312, %v377
    %v390 = vmul.f32 %v332, %v378
    %v391 = vmul.f32 %v352, %v379
    %v392 = vmul.f32 %v372, %v380
    %v393 = vadd.f32 %v387, %v388
    %v394 = vadd.f32 %v393, %v389
    %v395 = vadd.f32 %v394, %v390
    %v396 = vadd.f32 %v395, %v391
    %vm397 = vcmask 64512
    %v398 = vsel %vm397, %v392, 0.0
    %v399 = vadd.f32 %v396, %v398
    %400 = vadd.xlane.f32.xlu0 %v399
    %v401 = vpop.xlane.xlu0 %400
    %v402 = vmul.f32 %v401, 0.001953125
    %v403 = vsub.f32 %v272, %v402
    %v404 = vsub.f32 %v292, %v402
    %v405 = vsub.f32 %v312, %v402
    %v406 = vsub.f32 %v332, %v402
    %v407 = vsub.f32 %v352, %v402
    %v408 = vsub.f32 %v372, %v402
    %v409 = vmul.f32 %v403, %v375
    %v410 = vmul.f32 %v404, %v376
    %v411 = vmul.f32 %v405, %v377
    %v412 = vmul.f32 %v406, %v378
    %v413 = vmul.f32 %v407, %v379
    %v414 = vmul.f32 %v408, %v380
    %v415 = vmul.f32 %v409, %v409
    %v416 = vmul.f32 %v410, %v410
    %v417 = vmul.f32 %v411, %v411
    %v418 = vmul.f32 %v412, %v412
    %v419 = vmul.f32 %v413, %v413
    %v420 = vmul.f32 %v414, %v414
    %v421 = vadd.f32 %v415, %v416
    %v422 = vadd.f32 %v421, %v417
    %v423 = vadd.f32 %v422, %v418
    %v424 = vadd.f32 %v423, %v419
    %v425 = vsel %vm397, %v420, 0.0
    %v426 = vadd.f32 %v424, %v425
    %427 = vadd.xlane.f32.xlu0 %v426
    %v428 = vpop.xlane.xlu0 %427
    %v429 = vmul.f32 %v428, 0.001953125
    %v430 = vadd.f32 %v429, 1e-05
    %v431 = vrsqrt.pop %v430
    %v432 = vmul.f32 %v431, %v430
    %v433 = vmul.f32 %v432, %v431
    %v434 = vmul.f32 0.5, %v433
    %v435 = vsub.f32 1.5, %v434
    %v436 = vmul.f32 %v431, %v435
    %vm437 = vweird.f32 %v430
    %vm438 = vweird.f32 %v431
    %vm439 = vmor %vm437, %vm438
    %v440 = vsel %vm439, %v431, %v436
    %v441 = vmul.f32 %v403, %v440
    %v442 = vmul.f32 %v404, %v440
    %v443 = vmul.f32 %v405, %v440
    %v444 = vmul.f32 %v406, %v440
    %v445 = vmul.f32 %v407, %v440
    %v446 = vmul.f32 %v408, %v440
    %v447 = vld [vmem:[%s3] sm:$0xff]
    %449 = vset.pattern.permute.xlu0 0
    %450 = vperm.xlu0 %449, %v447
    %v451 = vpop.permute.xlu0 %450
    %v453 = vmul.f32 %v441, %v451
    %v454 = vmul.f32 %v442, %v451
    %v455 = vmul.f32 %v443, %v451
    %v456 = vmul.f32 %v444, %v451
    %v457 = vmul.f32 %v445, %v451
    %v458 = vmul.f32 %v446, %v451
    %v459 = vld [vmem:[%s4] sm:$0xff]
    %461 = vset.pattern.permute.xlu0 0
    %462 = vperm.xlu0 %461, %v459
    %v463 = vpop.permute.xlu0 %462
    %v465 = vadd.f32 %v453, %v463
    %v466 = vadd.f32 %v454, %v463
    %v467 = vadd.f32 %v455, %v463
    %v468 = vadd.f32 %v456, %v463
    %v469 = vadd.f32 %v457, %v463
    %v470 = vadd.f32 %v458, %v463
    %v471 = vmax.f32 %v465, 0.0
    %v472 = vmax.f32 %v466, 0.0
    %v473 = vmax.f32 %v467, 0.0
    %v474 = vmax.f32 %v468, 0.0
    %v475 = vmax.f32 %v469, 0.0
    %v476 = vmax.f32 %v470, 0.0
    %v477 = vmul.f32 %v471, %v375
    %v478 = vmul.f32 %v472, %v376
    %v479 = vmul.f32 %v473, %v377
    %v480 = vmul.f32 %v474, %v378
    %v481 = vmul.f32 %v475, %v379
    %v482 = vmul.f32 %v476, %v380
    %489 = vrot.lane.b32.xlu0 %v477, 19
    %v490 = vpop.permute.xlu0 %489
    %491 = vrot.lane.b32.xlu0 %v478, 19
    %v492 = vpop.permute.xlu0 %491
    %493 = vrot.lane.b32.xlu0 %v479, 19
    %v494 = vpop.permute.xlu0 %493
    %495 = vrot.lane.b32.xlu0 %v480, 19
    %v496 = vpop.permute.xlu0 %495
    %497 = vrot.lane.b32.xlu0 %v481, 19
    %v498 = vpop.permute.xlu0 %497
    %499 = vrot.lane.b32.xlu0 %v482, 19
    %v500 = vpop.permute.xlu0 %499
    %vm501 = vcmask 154624
    %v502 = vsel %vm501, %v490, %v492
    %v503 = vsel %vm501, %v492, %v494
    %v504 = vsel %vm501, %v494, %v496
    %v505 = vsel %vm501, %v496, %v498
    %v506 = vsel %vm501, %v498, %v500
    %v513 = vsel %vm501, 0.0, %v490
    %vm514 = vcmask 220160
    %v515 = vsel %vm514, %v506, 0.0
    %516 = vst [vmem:[#allocation2] sm:$0xff] %v513
    %517 = vst [vmem:[#allocation2 + $0x8] sm:$0xff] %v502
    %518 = vst [vmem:[#allocation2 + $0x10] sm:$0xff] %v503
    %519 = vst [vmem:[#allocation2 + $0x18] sm:$0xff] %v504
    %520 = vst [vmem:[#allocation2 + $0x20] sm:$0xff] %v505
    %vm521 = vcmask 375808
    %522 = vst.msk [vmem:[#allocation2 + $0x28] sm:$0xff] %vm521, %v515
    %v523 = vld [vmem:[#allocation2] sm:$0xff]
    %v524 = vld [vmem:[#allocation2 + $0x8] sm:$0xff]
    %v525 = vld [vmem:[#allocation2 + $0x10] sm:$0xff]
    %v526 = vld [vmem:[#allocation2 + $0x18] sm:$0xff]
    %v527 = vld [vmem:[#allocation2 + $0x20] sm:$0xff]
    %v528 = vld [vmem:[#allocation2 + $0x28] sm:$0xff]
    %535 = vrot.lane.b32.xlu0 %v523, 127
    %v536 = vpop.permute.xlu0 %535
    %537 = vrot.lane.b32.xlu0 %v524, 127
    %v538 = vpop.permute.xlu0 %537
    %539 = vrot.lane.b32.xlu0 %v525, 127
    %v540 = vpop.permute.xlu0 %539
    %541 = vrot.lane.b32.xlu0 %v526, 127
    %v542 = vpop.permute.xlu0 %541
    %543 = vrot.lane.b32.xlu0 %v527, 127
    %v544 = vpop.permute.xlu0 %543
    %545 = vrot.lane.b32.xlu0 %v528, 127
    %v546 = vpop.permute.xlu0 %545
    %v547 = vsel %vm69, %v536, %v538
    %v548 = vsel %vm69, %v538, %v540
    %v549 = vsel %vm69, %v540, %v542
    %v550 = vsel %vm69, %v542, %v544
    %v551 = vsel %vm69, %v544, %v546
    %558 = vrot.lane.b32.xlu0 %v523, 126
    %v559 = vpop.permute.xlu0 %558
    %560 = vrot.lane.b32.xlu0 %v524, 126
    %v561 = vpop.permute.xlu0 %560
    %562 = vrot.lane.b32.xlu0 %v525, 126
    %v563 = vpop.permute.xlu0 %562
    %564 = vrot.lane.b32.xlu0 %v526, 126
    %v565 = vpop.permute.xlu0 %564
    %566 = vrot.lane.b32.xlu0 %v527, 126
    %v567 = vpop.permute.xlu0 %566
    %568 = vrot.lane.b32.xlu0 %v528, 126
    %v569 = vpop.permute.xlu0 %568
    %v570 = vsel %vm93, %v559, %v561
    %v571 = vsel %vm93, %v561, %v563
    %v572 = vsel %vm93, %v563, %v565
    %v573 = vsel %vm93, %v565, %v567
    %v574 = vsel %vm93, %v567, %v569
    %581 = vrot.lane.b32.xlu0 %v523, 110
    %v582 = vpop.permute.xlu0 %581
    %583 = vrot.lane.b32.xlu0 %v524, 110
    %v584 = vpop.permute.xlu0 %583
    %585 = vrot.lane.b32.xlu0 %v525, 110
    %v586 = vpop.permute.xlu0 %585
    %587 = vrot.lane.b32.xlu0 %v526, 110
    %v588 = vpop.permute.xlu0 %587
    %589 = vrot.lane.b32.xlu0 %v527, 110
    %v590 = vpop.permute.xlu0 %589
    %591 = vrot.lane.b32.xlu0 %v528, 110
    %v592 = vpop.permute.xlu0 %591
    %v593 = vsel %vm117, %v582, %v584
    %v594 = vsel %vm117, %v584, %v586
    %v595 = vsel %vm117, %v586, %v588
    %v596 = vsel %vm117, %v588, %v590
    %v597 = vsel %vm117, %v590, %v592
    %604 = vrot.lane.b32.xlu0 %v523, 109
    %v605 = vpop.permute.xlu0 %604
    %606 = vrot.lane.b32.xlu0 %v524, 109
    %v607 = vpop.permute.xlu0 %606
    %608 = vrot.lane.b32.xlu0 %v525, 109
    %v609 = vpop.permute.xlu0 %608
    %610 = vrot.lane.b32.xlu0 %v526, 109
    %v611 = vpop.permute.xlu0 %610
    %612 = vrot.lane.b32.xlu0 %v527, 109
    %v613 = vpop.permute.xlu0 %612
    %614 = vrot.lane.b32.xlu0 %v528, 109
    %v615 = vpop.permute.xlu0 %614
    %v616 = vsel %vm141, %v605, %v607
    %v617 = vsel %vm141, %v607, %v609
    %v618 = vsel %vm141, %v609, %v611
    %v619 = vsel %vm141, %v611, %v613
    %v620 = vsel %vm141, %v613, %v615
    %627 = vrot.lane.b32.xlu0 %v523, 108
    %v628 = vpop.permute.xlu0 %627
    %629 = vrot.lane.b32.xlu0 %v524, 108
    %v630 = vpop.permute.xlu0 %629
    %631 = vrot.lane.b32.xlu0 %v525, 108
    %v632 = vpop.permute.xlu0 %631
    %633 = vrot.lane.b32.xlu0 %v526, 108
    %v634 = vpop.permute.xlu0 %633
    %635 = vrot.lane.b32.xlu0 %v527, 108
    %v636 = vpop.permute.xlu0 %635
    %637 = vrot.lane.b32.xlu0 %v528, 108
    %v638 = vpop.permute.xlu0 %637
    %v639 = vsel %vm165, %v628, %v630
    %v640 = vsel %vm165, %v630, %v632
    %v641 = vsel %vm165, %v632, %v634
    %v642 = vsel %vm165, %v634, %v636
    %v643 = vsel %vm165, %v636, %v638
    %650 = vrot.lane.b32.xlu0 %v523, 92
    %v651 = vpop.permute.xlu0 %650
    %652 = vrot.lane.b32.xlu0 %v524, 92
    %v653 = vpop.permute.xlu0 %652
    %654 = vrot.lane.b32.xlu0 %v525, 92
    %v655 = vpop.permute.xlu0 %654
    %656 = vrot.lane.b32.xlu0 %v526, 92
    %v657 = vpop.permute.xlu0 %656
    %658 = vrot.lane.b32.xlu0 %v527, 92
    %v659 = vpop.permute.xlu0 %658
    %660 = vrot.lane.b32.xlu0 %v528, 92
    %v661 = vpop.permute.xlu0 %660
    %v662 = vsel %vm189, %v651, %v653
    %v663 = vsel %vm189, %v653, %v655
    %v664 = vsel %vm189, %v655, %v657
    %v665 = vsel %vm189, %v657, %v659
    %v666 = vsel %vm189, %v659, %v661
    %673 = vrot.lane.b32.xlu0 %v523, 91
    %v674 = vpop.permute.xlu0 %673
    %675 = vrot.lane.b32.xlu0 %v524, 91
    %v676 = vpop.permute.xlu0 %675
    %677 = vrot.lane.b32.xlu0 %v525, 91
    %v678 = vpop.permute.xlu0 %677
    %679 = vrot.lane.b32.xlu0 %v526, 91
    %v680 = vpop.permute.xlu0 %679
    %681 = vrot.lane.b32.xlu0 %v527, 91
    %v682 = vpop.permute.xlu0 %681
    %683 = vrot.lane.b32.xlu0 %v528, 91
    %v684 = vpop.permute.xlu0 %683
    %v685 = vsel %vm213, %v674, %v676
    %v686 = vsel %vm213, %v676, %v678
    %v687 = vsel %vm213, %v678, %v680
    %v688 = vsel %vm213, %v680, %v682
    %v689 = vsel %vm213, %v682, %v684
    %696 = vrot.lane.b32.xlu0 %v523, 90
    %v697 = vpop.permute.xlu0 %696
    %698 = vrot.lane.b32.xlu0 %v524, 90
    %v699 = vpop.permute.xlu0 %698
    %700 = vrot.lane.b32.xlu0 %v525, 90
    %v701 = vpop.permute.xlu0 %700
    %702 = vrot.lane.b32.xlu0 %v526, 90
    %v703 = vpop.permute.xlu0 %702
    %704 = vrot.lane.b32.xlu0 %v527, 90
    %v705 = vpop.permute.xlu0 %704
    %706 = vrot.lane.b32.xlu0 %v528, 90
    %v707 = vpop.permute.xlu0 %706
    %v708 = vsel %vm237, %v697, %v699
    %v709 = vsel %vm237, %v699, %v701
    %v710 = vsel %vm237, %v701, %v703
    %v711 = vsel %vm237, %v703, %v705
    %v712 = vsel %vm237, %v705, %v707
    %v719 = vld [vmem:[%s2] sm:$0xff]
    %v721 = vsel %vm250, %v719, 0
    %723 = vmatpush.msra.mxu0 0.0
    %724 = vmatpush.msra.mxu0 0.0
    %725 = vmatpush.msra.mxu0 0.0
    %726 = vmatpush.msra.mxu0 0.0
    %727 = vmatpush.msra.mxu0 0.0
    %728 = vmatpush.msra.mxu0 0.0
    %729 = vmatpush.msra.mxu0 0.0
    %730 = vmatpush.msra.mxu0 %v708
    %731 = vmatpush.msra.mxu0 %v685
    %732 = vmatpush.msra.mxu0 %v662
    %733 = vmatpush.msra.mxu0 %v639
    %734 = vmatpush.msra.mxu0 %v616
    %735 = vmatpush.msra.mxu0 %v593
    %736 = vmatpush.msra.mxu0 %v570
    %737 = vmatpush.msra.mxu0 %v547
    %738 = vmatpush.msra.mxu0 %v523
    %739 = vmatmul.f32.gmra.mxu0 %v721
    %v740 = vpop.f32.mrf.mxu0
    %v741 = vadd.f32 0.0, %v740
    %742 = vdwg.mxu0
    %743 = vmatpush.msra.mxu0 0.0
    %744 = vmatpush.msra.mxu0 0.0
    %745 = vmatpush.msra.mxu0 0.0
    %746 = vmatpush.msra.mxu0 0.0
    %747 = vmatpush.msra.mxu0 0.0
    %748 = vmatpush.msra.mxu0 0.0
    %749 = vmatpush.msra.mxu0 0.0
    %750 = vmatpush.msra.mxu0 %v709
    %751 = vmatpush.msra.mxu0 %v686
    %752 = vmatpush.msra.mxu0 %v663
    %753 = vmatpush.msra.mxu0 %v640
    %754 = vmatpush.msra.mxu0 %v617
    %755 = vmatpush.msra.mxu0 %v594
    %756 = vmatpush.msra.mxu0 %v571
    %757 = vmatpush.msra.mxu0 %v548
    %758 = vmatpush.msra.mxu0 %v524
    %759 = vmatmul.f32.gmra.mxu0 %v721
    %v760 = vpop.f32.mrf.mxu0
    %v761 = vadd.f32 0.0, %v760
    %762 = vdwg.mxu0
    %763 = vmatpush.msra.mxu0 0.0
    %764 = vmatpush.msra.mxu0 0.0
    %765 = vmatpush.msra.mxu0 0.0
    %766 = vmatpush.msra.mxu0 0.0
    %767 = vmatpush.msra.mxu0 0.0
    %768 = vmatpush.msra.mxu0 0.0
    %769 = vmatpush.msra.mxu0 0.0
    %770 = vmatpush.msra.mxu0 %v710
    %771 = vmatpush.msra.mxu0 %v687
    %772 = vmatpush.msra.mxu0 %v664
    %773 = vmatpush.msra.mxu0 %v641
    %774 = vmatpush.msra.mxu0 %v618
    %775 = vmatpush.msra.mxu0 %v595
    %776 = vmatpush.msra.mxu0 %v572
    %777 = vmatpush.msra.mxu0 %v549
    %778 = vmatpush.msra.mxu0 %v525
    %779 = vmatmul.f32.gmra.mxu0 %v721
    %v780 = vpop.f32.mrf.mxu0
    %v781 = vadd.f32 0.0, %v780
    %782 = vdwg.mxu0
    %783 = vmatpush.msra.mxu0 0.0
    %784 = vmatpush.msra.mxu0 0.0
    %785 = vmatpush.msra.mxu0 0.0
    %786 = vmatpush.msra.mxu0 0.0
    %787 = vmatpush.msra.mxu0 0.0
    %788 = vmatpush.msra.mxu0 0.0
    %789 = vmatpush.msra.mxu0 0.0
    %790 = vmatpush.msra.mxu0 %v711
    %791 = vmatpush.msra.mxu0 %v688
    %792 = vmatpush.msra.mxu0 %v665
    %793 = vmatpush.msra.mxu0 %v642
    %794 = vmatpush.msra.mxu0 %v619
    %795 = vmatpush.msra.mxu0 %v596
    %796 = vmatpush.msra.mxu0 %v573
    %797 = vmatpush.msra.mxu0 %v550
    %798 = vmatpush.msra.mxu0 %v526
    %799 = vmatmul.f32.gmra.mxu0 %v721
    %v800 = vpop.f32.mrf.mxu0
    %v801 = vadd.f32 0.0, %v800
    %802 = vdwg.mxu0
    %803 = vmatpush.msra.mxu0 0.0
    %804 = vmatpush.msra.mxu0 0.0
    %805 = vmatpush.msra.mxu0 0.0
    %806 = vmatpush.msra.mxu0 0.0
    %807 = vmatpush.msra.mxu0 0.0
    %808 = vmatpush.msra.mxu0 0.0
    %809 = vmatpush.msra.mxu0 0.0
    %810 = vmatpush.msra.mxu0 %v712
    %811 = vmatpush.msra.mxu0 %v689
    %812 = vmatpush.msra.mxu0 %v666
    %813 = vmatpush.msra.mxu0 %v643
    %814 = vmatpush.msra.mxu0 %v620
    %815 = vmatpush.msra.mxu0 %v597
    %816 = vmatpush.msra.mxu0 %v574
    %817 = vmatpush.msra.mxu0 %v551
    %818 = vmatpush.msra.mxu0 %v527
    %819 = vmatmul.f32.gmra.mxu0 %v721
    %v820 = vpop.f32.mrf.mxu0
    %v821 = vadd.f32 0.0, %v820
    %822 = vdwg.mxu0
    %823 = vmatpush.msra.mxu0 0.0
    %824 = vmatpush.msra.mxu0 0.0
    %825 = vmatpush.msra.mxu0 0.0
    %826 = vmatpush.msra.mxu0 0.0
    %827 = vmatpush.msra.mxu0 0.0
    %828 = vmatpush.msra.mxu0 0.0
    %829 = vmatpush.msra.mxu0 0.0
    %830 = vmatpush.msra.mxu0 %v707
    %831 = vmatpush.msra.mxu0 %v684
    %832 = vmatpush.msra.mxu0 %v661
    %833 = vmatpush.msra.mxu0 %v638
    %834 = vmatpush.msra.mxu0 %v615
    %835 = vmatpush.msra.mxu0 %v592
    %836 = vmatpush.msra.mxu0 %v569
    %837 = vmatpush.msra.mxu0 %v546
    %838 = vmatpush.msra.mxu0 %v528
    %839 = vmatmul.f32.gmra.mxu0 %v721
    %v840 = vpop.f32.mrf.mxu0
    %v841 = vadd.f32 0.0, %v840
    %842 = vdwg.mxu0
    %v843 = vmul.f32 %v741, %v375
    %v844 = vmul.f32 %v761, %v376
    %v845 = vmul.f32 %v781, %v377
    %v846 = vmul.f32 %v801, %v378
    %v847 = vmul.f32 %v821, %v379
    %v848 = vmul.f32 %v841, %v380
    %v849 = vadd.f32 %v843, %v844
    %v850 = vadd.f32 %v849, %v845
    %v851 = vadd.f32 %v850, %v846
    %v852 = vadd.f32 %v851, %v847
    %v853 = vsel %vm397, %v848, 0.0
    %v854 = vadd.f32 %v852, %v853
    %855 = vadd.xlane.f32.xlu0 %v854
    %v856 = vpop.xlane.xlu0 %855
    %v857 = vmul.f32 %v856, 0.001953125
    %v858 = vsub.f32 %v741, %v857
    %v859 = vsub.f32 %v761, %v857
    %v860 = vsub.f32 %v781, %v857
    %v861 = vsub.f32 %v801, %v857
    %v862 = vsub.f32 %v821, %v857
    %v863 = vsub.f32 %v841, %v857
    %v864 = vmul.f32 %v858, %v375
    %v865 = vmul.f32 %v859, %v376
    %v866 = vmul.f32 %v860, %v377
    %v867 = vmul.f32 %v861, %v378
    %v868 = vmul.f32 %v862, %v379
    %v869 = vmul.f32 %v863, %v380
    %v870 = vmul.f32 %v864, %v864
    %v871 = vmul.f32 %v865, %v865
    %v872 = vmul.f32 %v866, %v866
    %v873 = vmul.f32 %v867, %v867
    %v874 = vmul.f32 %v868, %v868
    %v875 = vmul.f32 %v869, %v869
    %v876 = vadd.f32 %v870, %v871
    %v877 = vadd.f32 %v876, %v872
    %v878 = vadd.f32 %v877, %v873
    %v879 = vadd.f32 %v878, %v874
    %v880 = vsel %vm397, %v875, 0.0
    %v881 = vadd.f32 %v879, %v880
    %882 = vadd.xlane.f32.xlu0 %v881
    %v883 = vpop.xlane.xlu0 %882
    %v884 = vmul.f32 %v883, 0.001953125
    %v885 = vadd.f32 %v884, 1e-05
    %v886 = vrsqrt.pop %v885
    %v887 = vmul.f32 %v886, %v885
    %v888 = vmul.f32 %v887, %v886
    %v889 = vmul.f32 0.5, %v888
    %v890 = vsub.f32 1.5, %v889
    %v891 = vmul.f32 %v886, %v890
    %vm892 = vweird.f32 %v885
    %vm893 = vweird.f32 %v886
    %vm894 = vmor %vm892, %vm893
    %v895 = vsel %vm894, %v886, %v891
    %v896 = vmul.f32 %v858, %v895
    %v897 = vmul.f32 %v859, %v895
    %v898 = vmul.f32 %v860, %v895
    %v899 = vmul.f32 %v861, %v895
    %v900 = vmul.f32 %v862, %v895
    %v901 = vmul.f32 %v863, %v895
    %v902 = vld [vmem:[%s5] sm:$0xff]
    %904 = vset.pattern.permute.xlu0 0
    %905 = vperm.xlu0 %904, %v902
    %v906 = vpop.permute.xlu0 %905
    %v908 = vmul.f32 %v896, %v906
    %v909 = vmul.f32 %v897, %v906
    %v910 = vmul.f32 %v898, %v906
    %v911 = vmul.f32 %v899, %v906
    %v912 = vmul.f32 %v900, %v906
    %v913 = vmul.f32 %v901, %v906
    %v914 = vld [vmem:[%s6] sm:$0xff]
    %916 = vset.pattern.permute.xlu0 0
    %917 = vperm.xlu0 %916, %v914
    %v918 = vpop.permute.xlu0 %917
    %v920 = vadd.f32 %v908, %v918
    %v921 = vadd.f32 %v909, %v918
    %v922 = vadd.f32 %v910, %v918
    %v923 = vadd.f32 %v911, %v918
    %v924 = vadd.f32 %v912, %v918
    %v925 = vadd.f32 %v913, %v918
    %v926 = vadd.f32 %v920, %v142
    %v927 = vadd.f32 %v921, %v143
    %v928 = vadd.f32 %v922, %v144
    %v929 = vadd.f32 %v923, %v145
    %v930 = vadd.f32 %v924, %v146
    %v931 = vadd.f32 %v925, %v140
    %v932 = vmax.f32 %v926, 0.0
    %v933 = vmax.f32 %v927, 0.0
    %v934 = vmax.f32 %v928, 0.0
    %v935 = vmax.f32 %v929, 0.0
    %v936 = vmax.f32 %v930, 0.0
    %v937 = vmax.f32 %v931, 0.0
    %v938 = vmul.f32 %v932, %v375
    %v939 = vmul.f32 %v933, %v376
    %v940 = vmul.f32 %v934, %v377
    %v941 = vmul.f32 %v935, %v378
    %v942 = vmul.f32 %v936, %v379
    %v943 = vmul.f32 %v937, %v380
    %944 = vst [vmem:[#allocation6] sm:$0xff] %v938
    %945 = vst [vmem:[#allocation6 + $0x8] sm:$0xff] %v939
    %946 = vst [vmem:[#allocation6 + $0x10] sm:$0xff] %v940
    %947 = vst [vmem:[#allocation6 + $0x18] sm:$0xff] %v941
    %948 = vst [vmem:[#allocation6 + $0x20] sm:$0xff] %v942
    %949 = vst.msk [vmem:[#allocation6 + $0x28] sm:$0xff] %vm397, %v943
    // Predicated region
    $region38: #{tpu_custom_call.1} parent=1 // pred_check
      _
    $region39: #{tpu_custom_call.1} parent=1 // pred_check_branch
      %951 = sbr.rel (0) target = $region41
    $region40: #{tpu_custom_call.1} parent=1 // pred_region
      %953 = vsyncadd [#allocation5], 0
      %s955 = sshll.u32 [#allocation6], 4
      %s956 = int_to_ptr.vmem [resolvable:$true] %s955
      %s957 = sshll.u32 %s8, 4
      %s958 = int_to_ptr.hbm [resolvable:$true] %s957
      %960 = dma.vmem_to_hbm [thread:$0]  %s956, 768, %s958, [#allocation5]
    $region41: #{tpu_custom_call.1} parent=1 // pred_fallthru
      _
    // Predicated region
    $region42: #{tpu_custom_call.1} parent=1 // pred_check
      _
    $region43: #{tpu_custom_call.1} parent=1 // pred_check_branch
      %962 = sbr.rel (0) target = $region45
    $region44: #{tpu_custom_call.1} parent=1 // pred_region
      %964 = dma.done [#allocation5], 768
    $region45: #{tpu_custom_call.1} parent=1 // pred_fallthru
      _
    %965 = vsyncpa [#allocation4], 1
    %966 = vsyncpa [#allocation5], 1

</llo_original>
